<compile_context>
chip_gen: v7x
topology: tpu7x:2x2x1
jax: 0.10.0
libtpu: 0.0.40
codegen_flags: <defaults>
</compile_context>

<pallas_src>
import functools

import jax
import jax.numpy as jnp
from jax.experimental import pallas as pl
from jax.experimental.pallas import tpu as pltpu

EPS = 1e-5          # torch.nn.LayerNorm default eps
LOG_FLOOR = -60.0   # underflow guard for fuzzy firing strengths (logf <= 0)


def classify_fls_kernel(xin_ref, wpack_ref, out_ref, *,
                        dims, layout, approx_recip):
    """Full ClassifyFLS forward for one batch tile.

    Everything stays 2-D and lane-dense ([batch_tile, features]); all
    per-feature / per-model structure lives in block-diagonal weight matrices
    prebuilt by the wrapper, so the kernel is a short chain of small MXU
    passes with no in-kernel transposes / reshapes / gathers.
    """
    X, T, R, M = dims
    XT = X * T
    f32 = jnp.float32

    def w(name):                               # static, sublane-aligned slice
        off, r, c = layout[name]
        return wpack_ref[off:off + r, :c]

    xin = xin_ref[...].astype(f32)             # [BB, X*T + X]
    x2d = xin[:, :XT]                          # [BB, X*T]  (row-major i*T + t)
    xlast = xin[:, XT:]                        # [BB, X]    (pre-sliced x[..., -1])
    bb = x2d.shape[0]

    # ---- LayerNorm over TimeWin, in the flat [BB, X*T] layout ----
    # Row-stack trick: mean and E[x^2] from a single MXU pass.
    stacked = jnp.concatenate([x2d, x2d * x2d], axis=0)                   # [2BB, XT]
    mom = jnp.dot(stacked, w("wmean"), preferred_element_type=f32)        # [2BB, X]
    mean, ex2 = mom[:bb], mom[bb:]
    var = ex2 - mean * mean        # one-pass variance (fine for O(1) signals)
    rstd = jax.lax.rsqrt(var + EPS)
    pair = jnp.concatenate([rstd, mean * rstd], axis=0)                   # [2BB, X]
    pair_e = jnp.dot(pair, w("expx"), preferred_element_type=f32)         # [2BB, XT]
    norm = (x2d * pair_e[:bb] - pair_e[bb:]) * w("gamma") + w("beta")     # [BB, XT]

    # ---- FLS1: all X fuzzy layers as block-diagonal contractions ----
    # log firing = -( sum_t n^2*A1 + n*B1 + K1 ); sign and K folded into the
    # packed constants.  Quad/lin terms are two independent MXU pushes.
    logf1 = (jnp.dot(norm * norm, w("w1q"), preferred_element_type=f32)
             + jnp.dot(norm, w("w1l"), preferred_element_type=f32)
             + w("b1"))                                                   # [BB, X*R]
    f1 = jnp.exp(jnp.maximum(logf1, LOG_FLOOR))
    # w1-weighted numerator and per-feature firing sum in ONE pass.
    p1 = jnp.dot(f1, w("w1post"), preferred_element_type=f32)             # [BB, M*X + X]
    numer1, denom1 = p1[:, :M * X], p1[:, M * X:]
    inv1 = pl.reciprocal(denom1, approx=approx_recip)                     # [BB, X]
    inv1e = jnp.dot(inv1, w("tilex"), preferred_element_type=f32)         # [BB, M*X]
    ys = numer1 * inv1e                                                   # [BB, M*X] (m*X + i)

    # ---- FLS2: shared fuzzy layer over xDim, block-diag over the M models ----
    logf2 = (jnp.dot(ys * ys, w("w2q"), preferred_element_type=f32)
             + jnp.dot(ys, w("w2l"), preferred_element_type=f32)
             + w("b2"))                                                   # [BB, M*R]
    f2 = jnp.exp(jnp.maximum(logf2, LOG_FLOOR))
    p2 = jnp.dot(f2, w("w2post"), preferred_element_type=f32)             # [BB, 2M]
    cls = p2[:, :M] * pl.reciprocal(p2[:, M:], approx=approx_recip)       # [BB, M]

    # ---- softmax over the model axis (kept exact; tiny tensor) ----
    cls = cls - jnp.max(cls, axis=-1, keepdims=True)
    e = jnp.exp(cls)
    soft = e / jnp.sum(e, axis=-1, keepdims=True)                         # [BB, M]

    # ---- PhysicalPred on the last raw time step + weighted combine ----
    pm = jnp.dot(xlast, w("wm2"), preferred_element_type=f32) + w("bm2")  # [BB, M*X]
    soft_e = jnp.dot(soft, w("expm"), preferred_element_type=f32)         # [BB, M*X]
    out = jnp.dot(pm * soft_e, w("gsum"), preferred_element_type=f32)     # [BB, X]
    out_ref[...] = out.astype(out_ref.dtype)


def _pack_weights(params, X, T, R, M):
    """Fold all constants and pack them into one f32 buffer (single DMA).

    Returns (wpack [rows, width], layout {name: (row_off, rows, cols)}).
    Every block starts on an 8-row boundary so in-kernel loads stay
    sublane-aligned (no relayout).
    """
    f32 = jnp.float32
    XT = X * T
    eye_x = jnp.eye(X, dtype=f32)
    eye_m = jnp.eye(M, dtype=f32)

    c1 = params["c1"].astype(f32); s1 = params["s1"].astype(f32)
    c2 = params["c2"].astype(f32); s2 = params["s2"].astype(f32)
    a1 = 1.0 / (2.0 * s1 * s1)                  # [X, T, R]
    b1 = -c1 / (s1 * s1)
    k1 = jnp.sum(c1 * c1 * a1, axis=1)          # [X, R]
    a2 = 1.0 / (2.0 * s2 * s2)                  # [X, R]
    b2 = -c2 / (s2 * s2)
    k2 = jnp.sum(c2 * c2 * a2, axis=0)          # [R]

    def bd1(m):     # [X, T, R] -> block-diag over xDim: [X*T, X*R]
        return jnp.einsum('ij,itr->itjr', eye_x, m).reshape(XT, X * R)

    def bd2(m):     # [X, R]    -> block-diag over models: [M*X, M*R]
        return jnp.einsum('mp,ir->mipr', eye_m, m).reshape(M * X, M * R)

    w1 = params["w1"].astype(f32)               # [X, R, M]
    w1post = jnp.concatenate(
        [jnp.einsum('ij,irm->irmj', eye_x, w1).reshape(X * R, M * X),
         jnp.kron(eye_x, jnp.ones((R, 1), f32))], axis=1)          # [X*R, M*X + X]

    w2v = params["w2"].astype(f32).reshape(R, 1)
    w2post = jnp.concatenate(
        [jnp.kron(eye_m, w2v), jnp.kron(eye_m, jnp.ones((R, 1), f32))],
        axis=1)                                                    # [M*R, 2M]

    named = {
        # LayerNorm helpers (segment mean + lane expansion, MXU-routed)
        "wmean": jnp.kron(eye_x, jnp.ones((T, 1), f32)) / T,       # [XT, X]
        "expx":  jnp.kron(eye_x, jnp.ones((1, T), f32)),           # [X, XT]
        "gamma": jnp.tile(params["gamma"].astype(f32).reshape(-1), X).reshape(1, XT),
        "beta":  jnp.tile(params["beta"].astype(f32).reshape(-1), X).reshape(1, XT),
        # FLS1 (per-feature Gaussian TSK), block-diagonal over xDim
        "w1q": -bd1(a1), "w1l": -bd1(b1), "b1": -k1.reshape(1, X * R),
        "w1post": w1post,
        "tilex": jnp.kron(jnp.ones((1, M), f32), eye_x),           # [X, M*X]
        # FLS2 (shared over xDim), block-diagonal over the M models
        "w2q": -bd2(a2), "w2l": -bd2(b2),
        "b2": jnp.tile(-k2, (M,)).reshape(1, M * R),
        "w2post": w2post,
        # PhysicalPred (M linear models fused) + final weighted combine
        "wm2": jnp.transpose(params["wm"].astype(f32), (2, 0, 1)).reshape(X, M * X),
        "bm2": params["bm"].astype(f32).reshape(1, M * X),
        "expm": jnp.kron(eye_m, jnp.ones((1, X), f32)),            # [M, M*X]
        "gsum": jnp.kron(jnp.ones((M, 1), f32), eye_x),            # [M*X, X]
    }
    width = max(v.shape[1] for v in named.values())
    blocks, layout, off = [], {}, 0
    for name, v in named.items():
        r, c = v.shape
        rp = -(-r // 8) * 8
        blocks.append(jnp.zeros((rp, width), f32).at[:r, :c].set(v))
        layout[name] = (off, r, c)
        off += rp
    return jnp.concatenate(blocks, axis=0), layout


@functools.partial(jax.jit, static_argnames=("block_b", "approx_recip"))
def classify_fls(x, params, block_b=None, approx_recip=True):
    B, X, T = x.shape
    R = params["c1"].shape[-1]
    M = params["w1"].shape[-1]
    f32 = jnp.float32

    if block_b is None:
        # Small/medium B: whole problem resident in VMEM, one grid step.
        # Large B: tile so the BlockSpec pipeline overlaps HBM DMA with compute
        # and the grid has >= 2 "parallel" steps (v7x has 2 TensorCores and
        # only 64 MiB VMEM vs 128 MiB on v5e/v6e).
        block_b = B if B <= 512 else 512
    if B % block_b != 0:
        block_b = B

    wpack, layout = _pack_weights(params, X, T, R, M)

    # Batch-dependent data as ONE lane-dense slab: [flattened x | last step].
    # x[..., -1] is sliced here (fused by XLA) so the kernel never re-layouts
    # the time axis to extract it.
    xin = jnp.concatenate(
        [x.reshape(B, X * T).astype(f32), x[:, :, -1].astype(f32)], axis=-1)

    kernel = functools.partial(classify_fls_kernel, dims=(X, T, R, M),
                               layout=layout, approx_recip=approx_recip)
    out2d = pl.pallas_call(
        kernel,
        grid=(B // block_b,),
        in_specs=[pl.BlockSpec((block_b, X * T + X), lambda i: (i, 0)),
                  pl.BlockSpec(wpack.shape, lambda i: (0, 0))],  # resident params
        # NOTE: for very large block_b one could emit the result transposed
        # ([X, block_b]) to make the store fully lane-dense; at demo scale the
        # [block_b, X] tile is a single masked vreg store.
        out_specs=pl.BlockSpec((block_b, X), lambda i: (i, 0)),
        out_shape=jax.ShapeDtypeStruct((B, X), f32),
        compiler_params=pltpu.CompilerParams(
            dimension_semantics=("parallel",)),
    )(xin, wpack)
    return out2d[..., None]                     # [B, X, 1]


def classify_fls_ref(x, p):
    """Pure-JAX reference, mirrors the PyTorch forward (assumed submodules)."""
    mean = jnp.mean(x, -1, keepdims=True)
    var = jnp.mean((x - mean) ** 2, -1, keepdims=True)
    norm = (x - mean) / jnp.sqrt(var + EPS) * p["gamma"][None] + p["beta"][None]

    last = x[:, :, -1]
    pm = jnp.einsum("mjk,bk->bmj", p["wm"], last) + p["bm"][None]

    d1 = norm[:, :, :, None] - p["c1"][None]
    logf1 = -jnp.sum(d1 ** 2 / (2.0 * p["s1"][None] ** 2), axis=2)
    fn1 = jax.nn.softmax(logf1, axis=-1)
    ys = jnp.einsum("bir,irm->bim", fn1, p["w1"])
    rtn = ys.transpose(0, 2, 1)

    d2 = rtn[:, :, :, None] - p["c2"][None, None]
    logf2 = -jnp.sum(d2 ** 2 / (2.0 * p["s2"][None, None] ** 2), axis=2)
    fn2 = jax.nn.softmax(logf2, axis=-1)
    cls = jnp.einsum("bmr,r->bm", fn2, p["w2"][0])[..., None]
    soft = jax.nn.softmax(cls, axis=-2)
    return jnp.sum(pm * soft, axis=-2)[..., None]


def init_params(key, x_dim, time_win, rule_num, model_num):
    ks = jax.random.split(key, 9)
    u = lambda k, s: jax.random.uniform(k, s, jnp.float32, -1.0, 1.0)
    return {
        # LayerNorm(TimeWin)
        "gamma": jnp.ones((1, time_win), jnp.float32),
        "beta": jnp.zeros((1, time_win), jnp.float32),
        # MovementModels: M linear maps xDim -> xDim
        "wm": u(ks[0], (model_num, x_dim, x_dim)) * 0.5,
        "bm": u(ks[1], (model_num, x_dim)) * 0.1,
        # FLS_List: xDim stacked FLSLayer(TimeWin, rule_num, PModel_Num)
        "c1": u(ks[2], (x_dim, time_win, rule_num)),
        "s1": jax.random.uniform(ks[3], (x_dim, time_win, rule_num),
                                 jnp.float32, 0.5, 1.5),
        "w1": u(ks[4], (x_dim, rule_num, model_num)),
        # FLS2: FLSLayer(xDim, rule_num) with scalar output
        "c2": u(ks[5], (x_dim, rule_num)),
        "s2": jax.random.uniform(ks[6], (x_dim, rule_num),
                                 jnp.float32, 0.5, 1.5),
        "w2": u(ks[7], (1, rule_num)),
    }


if __name__ == "__main__":
    B, X_DIM, TIME_WIN, RULE_NUM, MODEL_NUM = 8, 9, 5, 16, 4

    key = jax.random.PRNGKey(0)
    kx, kp = jax.random.split(key)
    x = jax.random.normal(kx, (B, X_DIM, TIME_WIN), jnp.float32)
    params = init_params(kp, X_DIM, TIME_WIN, RULE_NUM, MODEL_NUM)

    ref = jax.block_until_ready(classify_fls_ref(x, params))

    # Exact-reciprocal path: validates the block-diagonal rewrite tightly.
    out_exact = jax.block_until_ready(
        classify_fls(x, params, approx_recip=False))
    assert out_exact.shape == (B, X_DIM, 1)
    assert jnp.allclose(out_exact, ref, atol=5e-4, rtol=5e-4), (
        f"max err {jnp.max(jnp.abs(out_exact - ref))}")

    # Default fast path: approx reciprocal on the two inner FLS normalizations.
    out = jax.block_until_ready(classify_fls(x, params, approx_recip=True))
    assert out.shape == (B, X_DIM, 1)
    assert jnp.allclose(out, ref, atol=5e-3, rtol=5e-3), (
        f"max err {jnp.max(jnp.abs(out - ref))}")

    print("KERNEL_OK")
</pallas_src>

<mosaic_0001>
module attributes {stable_mosaic.version = 11 : i64} {
  func.func @classify_fls_kernel(%arg0: i32, %arg1: memref<8x54xf32, #tpu.memory_space<vmem>>, %arg2: memref<568x144xf32, #tpu.memory_space<vmem>>, %arg3: memref<8x9xf32, #tpu.memory_space<vmem>>) attributes {dimension_semantics = [#tpu.dimension_semantics<parallel>], iteration_bounds = array<i64: 1>, scalar_prefetch = 0 : i64, scratch_operands = 0 : i64, tpu.core_type = #tpu.core_type<tc>, window_params = [{transform_indices = @transform_0, window_bounds = array<i64: 8, 54>}, {pipeline_mode = #tpu.pipeline_mode<synchronous>, transform_indices = @transform_1, window_bounds = array<i64: 568, 144>}, {transform_indices = @transform_2, window_bounds = array<i64: 8, 9>}]} {
    %c0 = arith.constant 0 : index
    %c0_0 = arith.constant 0 : index
    %0 = vector.load %arg1[%c0, %c0_0] : memref<8x54xf32, #tpu.memory_space<vmem>>, vector<8x54xf32>
    %1 = vector.extract_strided_slice %0 {offsets = [0, 0], sizes = [8, 45], strides = [1, 1]} : vector<8x54xf32> to vector<8x45xf32>
    %2 = vector.extract_strided_slice %0 {offsets = [0, 45], sizes = [8, 9], strides = [1, 1]} : vector<8x54xf32> to vector<8x9xf32>
    %3 = arith.mulf %1, %1 : vector<8x45xf32>
    %4 = tpu.concatenate %1, %3 in 0 : vector<8x45xf32>, vector<8x45xf32> -> vector<16x45xf32>
    %c0_1 = arith.constant 0 : index
    %c0_2 = arith.constant 0 : index
    %5 = vector.load %arg2[%c0_1, %c0_2] : memref<568x144xf32, #tpu.memory_space<vmem>>, vector<45x9xf32>
    %cst = arith.constant dense<0.000000e+00> : vector<16x9xf32>
    %6 = tpu.matmul %4, %5, %cst {dimension_numbers = #tpu.dot_dimension_numbers<[1], [0], [0], [1], [0, 0, 1, 1], [], []>} : vector<16x45xf32>, vector<45x9xf32>, vector<16x9xf32> -> vector<16x9xf32>
    %7 = vector.extract_strided_slice %6 {offsets = [0, 0], sizes = [8, 9], strides = [1, 1]} : vector<16x9xf32> to vector<8x9xf32>
    %8 = vector.extract_strided_slice %6 {offsets = [8, 0], sizes = [8, 9], strides = [1, 1]} : vector<16x9xf32> to vector<8x9xf32>
    %9 = arith.mulf %7, %7 : vector<8x9xf32>
    %10 = arith.subf %8, %9 : vector<8x9xf32>
    %cst_3 = arith.constant 9.99999974E-6 : f32
    %11 = vector.broadcast %cst_3 : f32 to vector<8x9xf32>
    %12 = arith.addf %10, %11 : vector<8x9xf32>
    %13 = math.rsqrt %12 : vector<8x9xf32>
    %14 = arith.mulf %7, %13 : vector<8x9xf32>
    %15 = tpu.concatenate %13, %14 in 0 : vector<8x9xf32>, vector<8x9xf32> -> vector<16x9xf32>
    %c48 = arith.constant 48 : index
    %c0_4 = arith.constant 0 : index
    %16 = vector.load %arg2[%c48, %c0_4] : memref<568x144xf32, #tpu.memory_space<vmem>>, vector<9x45xf32>
    %cst_5 = arith.constant dense<0.000000e+00> : vector<16x45xf32>
    %17 = tpu.matmul %15, %16, %cst_5 {dimension_numbers = #tpu.dot_dimension_numbers<[1], [0], [0], [1], [0, 0, 1, 1], [], []>} : vector<16x9xf32>, vector<9x45xf32>, vector<16x45xf32> -> vector<16x45xf32>
    %18 = vector.extract_strided_slice %17 {offsets = [0, 0], sizes = [8, 45], strides = [1, 1]} : vector<16x45xf32> to vector<8x45xf32>
    %19 = arith.mulf %1, %18 : vector<8x45xf32>
    %20 = vector.extract_strided_slice %17 {offsets = [8, 0], sizes = [8, 45], strides = [1, 1]} : vector<16x45xf32> to vector<8x45xf32>
    %21 = arith.subf %19, %20 : vector<8x45xf32>
    %c64 = arith.constant 64 : index
    %c0_6 = arith.constant 0 : index
    %22 = vector.load %arg2[%c64, %c0_6] : memref<568x144xf32, #tpu.memory_space<vmem>>, vector<1x45xf32>
    %23 = vector.broadcast %22 : vector<1x45xf32> to vector<8x45xf32>
    %24 = arith.mulf %21, %23 : vector<8x45xf32>
    %c72 = arith.constant 72 : index
    %c0_7 = arith.constant 0 : index
    %25 = vector.load %arg2[%c72, %c0_7] : memref<568x144xf32, #tpu.memory_space<vmem>>, vector<1x45xf32>
    %26 = vector.broadcast %25 : vector<1x45xf32> to vector<8x45xf32>
    %27 = arith.addf %24, %26 : vector<8x45xf32>
    %28 = arith.mulf %27, %27 : vector<8x45xf32>
    %c80 = arith.constant 80 : index
    %c0_8 = arith.constant 0 : index
    %29 = vector.load %arg2[%c80, %c0_8] : memref<568x144xf32, #tpu.memory_space<vmem>>, vector<45x144xf32>
    %cst_9 = arith.constant dense<0.000000e+00> : vector<8x144xf32>
    %30 = tpu.matmul %28, %29, %cst_9 {dimension_numbers = #tpu.dot_dimension_numbers<[1], [0], [0], [1], [0, 0, 1, 1], [], []>} : vector<8x45xf32>, vector<45x144xf32>, vector<8x144xf32> -> vector<8x144xf32>
    %c128 = arith.constant 128 : index
    %c0_10 = arith.constant 0 : index
    %31 = vector.load %arg2[%c128, %c0_10] : memref<568x144xf32, #tpu.memory_space<vmem>>, vector<45x144xf32>
    %cst_11 = arith.constant dense<0.000000e+00> : vector<8x144xf32>
    %32 = tpu.matmul %27, %31, %cst_11 {dimension_numbers = #tpu.dot_dimension_numbers<[1], [0], [0], [1], [0, 0, 1, 1], [], []>} : vector<8x45xf32>, vector<45x144xf32>, vector<8x144xf32> -> vector<8x144xf32>
    %33 = arith.addf %30, %32 : vector<8x144xf32>
    %c176 = arith.constant 176 : index
    %c0_12 = arith.constant 0 : index
    %34 = vector.load %arg2[%c176, %c0_12] : memref<568x144xf32, #tpu.memory_space<vmem>>, vector<1x144xf32>
    %35 = vector.broadcast %34 : vector<1x144xf32> to vector<8x144xf32>
    %36 = arith.addf %33, %35 : vector<8x144xf32>
    %cst_13 = arith.constant -6.000000e+01 : f32
    %37 = vector.broadcast %cst_13 : f32 to vector<8x144xf32>
    %38 = arith.maximumf %36, %37 : vector<8x144xf32>
    %39 = math.exp %38 : vector<8x144xf32>
    %c184 = arith.constant 184 : index
    %c0_14 = arith.constant 0 : index
    %40 = vector.load %arg2[%c184, %c0_14] : memref<568x144xf32, #tpu.memory_space<vmem>>, vector<144x45xf32>
    %cst_15 = arith.constant dense<0.000000e+00> : vector<8x45xf32>
    %41 = tpu.matmul %39, %40, %cst_15 {dimension_numbers = #tpu.dot_dimension_numbers<[1], [0], [0], [1], [0, 0, 1, 1], [], []>} : vector<8x144xf32>, vector<144x45xf32>, vector<8x45xf32> -> vector<8x45xf32>
    %42 = vector.extract_strided_slice %41 {offsets = [0, 0], sizes = [8, 36], strides = [1, 1]} : vector<8x45xf32> to vector<8x36xf32>
    %43 = vector.extract_strided_slice %41 {offsets = [0, 36], sizes = [8, 9], strides = [1, 1]} : vector<8x45xf32> to vector<8x9xf32>
    %44 = tpu.reciprocal %43 : vector<8x9xf32> -> vector<8x9xf32>
    %c328 = arith.constant 328 : index
    %c0_16 = arith.constant 0 : index
    %45 = vector.load %arg2[%c328, %c0_16] : memref<568x144xf32, #tpu.memory_space<vmem>>, vector<9x36xf32>
    %cst_17 = arith.constant dense<0.000000e+00> : vector<8x36xf32>
    %46 = tpu.matmul %44, %45, %cst_17 {dimension_numbers = #tpu.dot_dimension_numbers<[1], [0], [0], [1], [0, 0, 1, 1], [], []>} : vector<8x9xf32>, vector<9x36xf32>, vector<8x36xf32> -> vector<8x36xf32>
    %47 = arith.mulf %42, %46 : vector<8x36xf32>
    %48 = arith.mulf %47, %47 : vector<8x36xf32>
    %c344 = arith.constant 344 : index
    %c0_18 = arith.constant 0 : index
    %49 = vector.load %arg2[%c344, %c0_18] : memref<568x144xf32, #tpu.memory_space<vmem>>, vector<36x64xf32>
    %cst_19 = arith.constant dense<0.000000e+00> : vector<8x64xf32>
    %50 = tpu.matmul %48, %49, %cst_19 {dimension_numbers = #tpu.dot_dimension_numbers<[1], [0], [0], [1], [0, 0, 1, 1], [], []>} : vector<8x36xf32>, vector<36x64xf32>, vector<8x64xf32> -> vector<8x64xf32>
    %c384 = arith.constant 384 : index
    %c0_20 = arith.constant 0 : index
    %51 = vector.load %arg2[%c384, %c0_20] : memref<568x144xf32, #tpu.memory_space<vmem>>, vector<36x64xf32>
    %cst_21 = arith.constant dense<0.000000e+00> : vector<8x64xf32>
    %52 = tpu.matmul %47, %51, %cst_21 {dimension_numbers = #tpu.dot_dimension_numbers<[1], [0], [0], [1], [0, 0, 1, 1], [], []>} : vector<8x36xf32>, vector<36x64xf32>, vector<8x64xf32> -> vector<8x64xf32>
    %53 = arith.addf %50, %52 : vector<8x64xf32>
    %c424 = arith.constant 424 : index
    %c0_22 = arith.constant 0 : index
    %54 = vector.load %arg2[%c424, %c0_22] : memref<568x144xf32, #tpu.memory_space<vmem>>, vector<1x64xf32>
    %55 = vector.broadcast %54 : vector<1x64xf32> to vector<8x64xf32>
    %56 = arith.addf %53, %55 : vector<8x64xf32>
    %cst_23 = arith.constant -6.000000e+01 : f32
    %57 = vector.broadcast %cst_23 : f32 to vector<8x64xf32>
    %58 = arith.maximumf %56, %57 : vector<8x64xf32>
    %59 = math.exp %58 : vector<8x64xf32>
    %c432 = arith.constant 432 : index
    %c0_24 = arith.constant 0 : index
    %60 = vector.load %arg2[%c432, %c0_24] : memref<568x144xf32, #tpu.memory_space<vmem>>, vector<64x8xf32>
    %cst_25 = arith.constant dense<0.000000e+00> : vector<8x8xf32>
    %61 = tpu.matmul %59, %60, %cst_25 {dimension_numbers = #tpu.dot_dimension_numbers<[1], [0], [0], [1], [0, 0, 1, 1], [], []>} : vector<8x64xf32>, vector<64x8xf32>, vector<8x8xf32> -> vector<8x8xf32>
    %62 = vector.extract_strided_slice %61 {offsets = [0, 0], sizes = [8, 4], strides = [1, 1]} : vector<8x8xf32> to vector<8x4xf32>
    %63 = vector.extract_strided_slice %61 {offsets = [0, 4], sizes = [8, 4], strides = [1, 1]} : vector<8x8xf32> to vector<8x4xf32>
    %64 = tpu.reciprocal %63 : vector<8x4xf32> -> vector<8x4xf32>
    %65 = arith.mulf %62, %64 : vector<8x4xf32>
    %cst_26 = arith.constant dense<0xFF800000> : vector<8xf32>
    %66 = vector.multi_reduction <maximumf>, %65, %cst_26 [1] : vector<8x4xf32> to vector<8xf32>
    %67 = vector.shape_cast %66 : vector<8xf32> to vector<8x1xf32>
    %68 = vector.broadcast %67 : vector<8x1xf32> to vector<8x4xf32>
    %69 = arith.subf %65, %68 : vector<8x4xf32>
    %70 = math.exp %69 : vector<8x4xf32>
    %cst_27 = arith.constant dense<0.000000e+00> : vector<8xf32>
    %71 = vector.multi_reduction <add>, %70, %cst_27 [1] : vector<8x4xf32> to vector<8xf32>
    %72 = vector.shape_cast %71 : vector<8xf32> to vector<8x1xf32>
    %73 = vector.broadcast %72 : vector<8x1xf32> to vector<8x4xf32>
    %74 = arith.divf %70, %73 : vector<8x4xf32>
    %c496 = arith.constant 496 : index
    %c0_28 = arith.constant 0 : index
    %75 = vector.load %arg2[%c496, %c0_28] : memref<568x144xf32, #tpu.memory_space<vmem>>, vector<9x36xf32>
    %cst_29 = arith.constant dense<0.000000e+00> : vector<8x36xf32>
    %76 = tpu.matmul %2, %75, %cst_29 {dimension_numbers = #tpu.dot_dimension_numbers<[1], [0], [0], [1], [0, 0, 1, 1], [], []>} : vector<8x9xf32>, vector<9x36xf32>, vector<8x36xf32> -> vector<8x36xf32>
    %c512 = arith.constant 512 : index
    %c0_30 = arith.constant 0 : index
    %77 = vector.load %arg2[%c512, %c0_30] : memref<568x144xf32, #tpu.memory_space<vmem>>, vector<1x36xf32>
    %78 = vector.broadcast %77 : vector<1x36xf32> to vector<8x36xf32>
    %79 = arith.addf %76, %78 : vector<8x36xf32>
    %c520 = arith.constant 520 : index
    %c0_31 = arith.constant 0 : index
    %80 = vector.load %arg2[%c520, %c0_31] : memref<568x144xf32, #tpu.memory_space<vmem>>, vector<4x36xf32>
    %cst_32 = arith.constant dense<0.000000e+00> : vector<8x36xf32>
    %81 = tpu.matmul %74, %80, %cst_32 {dimension_numbers = #tpu.dot_dimension_numbers<[1], [0], [0], [1], [0, 0, 1, 1], [], []>} : vector<8x4xf32>, vector<4x36xf32>, vector<8x36xf32> -> vector<8x36xf32>
    %82 = arith.mulf %79, %81 : vector<8x36xf32>
    %c528 = arith.constant 528 : index
    %c0_33 = arith.constant 0 : index
    %83 = vector.load %arg2[%c528, %c0_33] : memref<568x144xf32, #tpu.memory_space<vmem>>, vector<36x9xf32>
    %cst_34 = arith.constant dense<0.000000e+00> : vector<8x9xf32>
    %84 = tpu.matmul %82, %83, %cst_34 {dimension_numbers = #tpu.dot_dimension_numbers<[1], [0], [0], [1], [0, 0, 1, 1], [], []>} : vector<8x36xf32>, vector<36x9xf32>, vector<8x9xf32> -> vector<8x9xf32>
    %c0_35 = arith.constant 0 : index
    %c0_36 = arith.constant 0 : index
    %85 = vector.load %arg3[%c0_35, %c0_36] : memref<8x9xf32, #tpu.memory_space<vmem>>, vector<8x9xf32>
    tpu.vector_store %arg3[%c0_35, %c0_36], %84 {strides = array<i32>} : memref<8x9xf32, #tpu.memory_space<vmem>>, vector<8x9xf32>,
    return
  }
  func.func @transform_0(%arg0: i32) -> (i32, i32) {
    %c0_i32 = arith.constant 0 : i32
    %c0_i32_0 = arith.constant 0 : i32
    return %arg0, %c0_i32 : i32, i32
  }
  func.func @transform_1(%arg0: i32) -> (i32, i32) {
    %c0_i32 = arith.constant 0 : i32
    %c0_i32_0 = arith.constant 0 : i32
    %c0_i32_1 = arith.constant 0 : i32
    return %c0_i32, %c0_i32_0 : i32, i32
  }
  func.func @transform_2(%arg0: i32) -> (i32, i32) {
    %c0_i32 = arith.constant 0 : i32
    %c0_i32_0 = arith.constant 0 : i32
    return %arg0, %c0_i32 : i32, i32
  }
}

</mosaic_0001>

<llo_original>
// kernel: tile.19
$region0: #{tile.19}
  #allocation0 [shape = 's32[1]{0}', space=sflag, size = 0x4, scoped, tag = 'scoped memory for tile.19']
  %s0 = inlined_call_operand.vmem [shape: f32[5], index: 0, kind: input, shape index: {}]
  %s1 = inlined_call_operand.vmem [shape: f32[9,5], index: 1, kind: output, shape index: {}]
  // Predicated region
  $region2: #{tile.19} parent=0 // pred_check
    _
  $region3: #{tile.19} parent=0 // pred_check_branch
    %3 = sbr.rel (0) target = $region5
  $region4: #{tile.19} parent=0 // pred_region
    _
  $region5: #{tile.19} parent=0 // pred_fallthru
    _
  %v4 = vld [vmem:[%s0] ss:$0 sm:$0xff]
  %5 = vst [vmem:[%s1] sm:$0xff] %v4
  %s6 = scalar_lea.vmem %s1, 8
  %7 = vst [vmem:[%s6] sm:$0xff] %v4

// kernel: neg.7
$region0: #{neg.7}
  #allocation0 [shape = 's32[1]{0}', space=sflag, size = 0x4, scoped, tag = 'scoped memory for neg.7']
  %s0 = inlined_call_operand.vmem [shape: f32[16], index: 0, kind: input, shape index: {}]
  %s1 = inlined_call_operand.vmem [shape: f32[16], index: 1, kind: output, shape index: {}]
  %v2 = vld [vmem:[%s0] sm:$0x1]
  %3 = xla_tuple %v2
  %4 = xla_tuple %3
  %v5 = vxor.u32 %v2, 2147483648
  %6 = xla_tuple %v5
  %7 = vst [vmem:[%s1] sm:$0x1] %v5

// kernel: neg.24
$region0: #{neg.24}
  #allocation0 [shape = 's32[1]{0}', space=sflag, size = 0x4, scoped, tag = 'scoped memory for neg.24']
  %s0 = inlined_call_operand.vmem [shape: f32[9,16], index: 0, kind: input, shape index: {}]
  %s1 = inlined_call_operand.vmem [shape: f32[9,16], index: 1, kind: output, shape index: {}]
  %v2 = vld [vmem:[%s0] sm:$0xff]
  %3 = xla_tuple %v2
  %4 = xla_tuple %3
  %v5 = vxor.u32 %v2, 2147483648
  %6 = xla_tuple %v5
  %7 = vst [vmem:[%s1] sm:$0xff] %v5
  %s8 = scalar_lea.vmem %s0, 8
  %v9 = vld [vmem:[%s8] sm:$0xff]
  %10 = xla_tuple %v9
  %11 = xla_tuple %10
  %v12 = vxor.u32 %v9, 2147483648
  %13 = xla_tuple %v12
  %s14 = scalar_lea.vmem %s1, 8
  %15 = vst [vmem:[%s14] sm:$0xff] %v12

// kernel: classify_fls.1
$region0: #{classify_fls.1}
  #allocation0 [shape = 'u32[]', space=smem, size = 0x4, offset = 0x4, fixed_abs, tag = 'smem constant byte address 0x4 - core index']
  #allocation1 [shape = 'u32[144,128]{1,0:T(1,128)}', space=vmem, size = 0x12000, scoped, tag = 'internal scratch']
  %s0 = inlined_call_operand.vmem [shape: f32[8,54], index: 0, kind: input, shape index: {}]
  %s1 = inlined_call_operand.vmem [shape: f32[568,144], index: 1, kind: input, shape index: {}]
  %s2 = inlined_call_operand.hbm [shape: f32[8,9], index: 2, kind: output, shape index: {}]
  %s3 = sld [smem:[#allocation0]]
  $region18: #{classify_fls.1} parent=0
    _
  %s5 = ssub.s32 1, %s3
  %s6 = scalar_select 0, %s5, %s3
  $region1: #{classify_fls.1} parent=0
    #allocation2 [shape = 'u8[4096]{0}', space=vmem, size = 0x1000, scoped, tag = 'output window, operand 0, single buffered']
    #allocation3 [shape = 's32[1]{0}', space=sflag, size = 0x4, scoped, tag = 'scoped memory for classify_fls.1']
    %7 = vsyncpa [#allocation3], 0
    // Predicated region
    $region2: #{classify_fls.1} parent=1 // pred_check
      _
    $region3: #{classify_fls.1} parent=1 // pred_check_branch
      %9 = sbr.rel (0) target = $region5
    $region4: #{classify_fls.1} parent=1 // pred_region
      _
    $region5: #{classify_fls.1} parent=1 // pred_fallthru
      _
    // Predicated region
    $region6: #{classify_fls.1} parent=1 // pred_check
      _
    $region7: #{classify_fls.1} parent=1 // pred_check_branch
      %11 = sbr.rel (0) target = $region9
    $region8: #{classify_fls.1} parent=1 // pred_region
      _
    $region9: #{classify_fls.1} parent=1 // pred_fallthru
      _
    %v12 = vld [vmem:[%s0] sm:$0xff]
    %v13 = vmul.f32 %v12, %v12
    %v14 = vld [vmem:[%s1] sm:$0xff]
    %v15 = vld [vmem:[%s1 + $0x10] sm:$0xff]
    %v16 = vld [vmem:[%s1 + $0x20] sm:$0xff]
    %v17 = vld [vmem:[%s1 + $0x30] sm:$0xff]
    %v18 = vld [vmem:[%s1 + $0x40] sm:$0xff]
    %v19 = vld [vmem:[%s1 + $0x50] sm:$0x1f]
    %vm20 = vcmask 367616
    %v22 = vsel %vm20, %v12, 0
    %v25 = vsel %vm20, %v13, 0
    %vm27 = vcmask 1044480
    %v29 = vsel %vm27, %v19, 0
    %31 = vmatprep.subr.mxu0 0.0
    %32 = vmatpush1.msra.mxu0 %v14
    %33 = vmatprep.subr.mxu0 0.0
    %34 = vmatpush1.msra.mxu0 %v15
    %35 = vmatprep.subr.mxu0 0.0
    %36 = vmatpush1.msra.mxu0 %v16
    %37 = vmatprep.subr.mxu0 0.0
    %38 = vmatpush1.msra.mxu0 %v17
    %39 = vmatprep.subr.mxu0 0.0
    %40 = vmatpush1.msra.mxu0 %v18
    %41 = vmatprep.subr.mxu0 0.0
    %42 = vmatpush1.msra.mxu0 %v29
    %43 = vmatprep.subr.mxu0 0.0
    %44 = vmatpush1.msra.mxu0 0.0
    %45 = vmatprep.subr.mxu0 0.0
    %46 = vmatpush1.msra.mxu0 0.0
    %47 = vmatprep.subr.mxu0 0.0
    %48 = vmatpush1.msra.mxu0 0.0
    %49 = vmatprep.subr.mxu0 0.0
    %50 = vmatpush1.msra.mxu0 0.0
    %51 = vmatprep.subr.mxu0 0.0
    %52 = vmatpush1.msra.mxu0 0.0
    %53 = vmatprep.subr.mxu0 0.0
    %54 = vmatpush1.msra.mxu0 0.0
    %55 = vmatprep.subr.mxu0 0.0
    %56 = vmatpush1.msra.mxu0 0.0
    %57 = vmatprep.subr.mxu0 0.0
    %58 = vmatpush1.msra.mxu0 0.0
    %59 = vmatprep.subr.mxu0 0.0
    %60 = vmatpush1.msra.mxu0 0.0
    %61 = vmatprep.subr.mxu0 0.0
    %62 = vmatpush1.msra.mxu0 0.0
    %63 = vmatprep.subr.mxu0 0.0
    %64 = vmatpush1.msra.mxu0 0.0
    %65 = vmatprep.subr.mxu0 0.0
    %66 = vmatpush1.msra.mxu0 0.0
    %67 = vmatprep.subr.mxu0 0.0
    %68 = vmatpush1.msra.mxu0 0.0
    %69 = vmatprep.subr.mxu0 0.0
    %70 = vmatpush1.msra.mxu0 0.0
    %71 = vmatprep.subr.mxu0 0.0
    %72 = vmatpush1.msra.mxu0 0.0
    %73 = vmatprep.subr.mxu0 0.0
    %74 = vmatpush1.msra.mxu0 0.0
    %75 = vmatprep.subr.mxu0 0.0
    %76 = vmatpush1.msra.mxu0 0.0
    %77 = vmatprep.subr.mxu0 0.0
    %78 = vmatpush1.msra.mxu0 0.0
    %79 = vmatprep.subr.mxu0 0.0
    %80 = vmatpush1.msra.mxu0 0.0
    %81 = vmatprep.subr.mxu0 0.0
    %82 = vmatpush1.msra.mxu0 0.0
    %83 = vmatprep.subr.mxu0 0.0
    %84 = vmatpush1.msra.mxu0 0.0
    %85 = vmatprep.subr.mxu0 0.0
    %86 = vmatpush1.msra.mxu0 0.0
    %87 = vmatprep.subr.mxu0 0.0
    %88 = vmatpush1.msra.mxu0 0.0
    %89 = vmatprep.subr.mxu0 0.0
    %90 = vmatpush1.msra.mxu0 0.0
    %91 = vmatprep.subr.mxu0 0.0
    %92 = vmatpush1.msra.mxu0 0.0
    %93 = vmatprep.subr.mxu0 0.0
    %94 = vmatpush1.msra.mxu0 0.0
    %95 = vmatprep.mubr.f32.mxu0 0.0
    %96 = vmatmul.mubr.f32.gmra.mrb[0].mxu0 %v22
    %v97 = vpop.f32.mrb[0].mxu0
    %v98 = vadd.f32 0.0, %v97
    %v99 = vpop.f32.mrb[0].mxu0
    %100 = vmatprep.mubr.f32.mxu0 0.0
    %101 = vmatmul.mubr.f32.gmra.mrb[0].mxu0 %v25
    %v102 = vpop.f32.mrb[0].mxu0
    %v103 = vadd.f32 0.0, %v102
    %v104 = vpop.f32.mrb[0].mxu0
    %105 = vdwg.mxu0
    %v106 = vmul.f32 %v98, %v98
    %v107 = vsub.f32 %v103, %v106
    %v108 = vadd.f32 %v107, 1e-05
    %v109 = vrsqrt.pop %v108
    %v110 = vmul.f32 %v98, %v109
    %v111 = vld [vmem:[%s1 + $0x60] sm:$0xff]
    %v112 = vld [vmem:[%s1 + $0x70] sm:$0x1]
    %vm113 = vcmask 72704
    %v115 = vsel %vm113, %v109, 0
    %v118 = vsel %vm113, %v110, 0
    %vm120 = vcmask 1040384
    %v122 = vsel %vm120, %v112, 0
    %124 = vmatprep.subr.mxu0 0.0
    %125 = vmatpush1.msra.mxu0 %v111
    %126 = vmatprep.subr.mxu0 0.0
    %127 = vmatpush1.msra.mxu0 %v122
    %128 = vmatprep.subr.mxu0 0.0
    %129 = vmatpush1.msra.mxu0 0.0
    %130 = vmatprep.subr.mxu0 0.0
    %131 = vmatpush1.msra.mxu0 0.0
    %132 = vmatprep.subr.mxu0 0.0
    %133 = vmatpush1.msra.mxu0 0.0
    %134 = vmatprep.subr.mxu0 0.0
    %135 = vmatpush1.msra.mxu0 0.0
    %136 = vmatprep.subr.mxu0 0.0
    %137 = vmatpush1.msra.mxu0 0.0
    %138 = vmatprep.subr.mxu0 0.0
    %139 = vmatpush1.msra.mxu0 0.0
    %140 = vmatprep.subr.mxu0 0.0
    %141 = vmatpush1.msra.mxu0 0.0
    %142 = vmatprep.subr.mxu0 0.0
    %143 = vmatpush1.msra.mxu0 0.0
    %144 = vmatprep.subr.mxu0 0.0
    %145 = vmatpush1.msra.mxu0 0.0
    %146 = vmatprep.subr.mxu0 0.0
    %147 = vmatpush1.msra.mxu0 0.0
    %148 = vmatprep.subr.mxu0 0.0
    %149 = vmatpush1.msra.mxu0 0.0
    %150 = vmatprep.subr.mxu0 0.0
    %151 = vmatpush1.msra.mxu0 0.0
    %152 = vmatprep.subr.mxu0 0.0
    %153 = vmatpush1.msra.mxu0 0.0
    %154 = vmatprep.subr.mxu0 0.0
    %155 = vmatpush1.msra.mxu0 0.0
    %156 = vmatprep.subr.mxu0 0.0
    %157 = vmatpush1.msra.mxu0 0.0
    %158 = vmatprep.subr.mxu0 0.0
    %159 = vmatpush1.msra.mxu0 0.0
    %160 = vmatprep.subr.mxu0 0.0
    %161 = vmatpush1.msra.mxu0 0.0
    %162 = vmatprep.subr.mxu0 0.0
    %163 = vmatpush1.msra.mxu0 0.0
    %164 = vmatprep.subr.mxu0 0.0
    %165 = vmatpush1.msra.mxu0 0.0
    %166 = vmatprep.subr.mxu0 0.0
    %167 = vmatpush1.msra.mxu0 0.0
    %168 = vmatprep.subr.mxu0 0.0
    %169 = vmatpush1.msra.mxu0 0.0
    %170 = vmatprep.subr.mxu0 0.0
    %171 = vmatpush1.msra.mxu0 0.0
    %172 = vmatprep.subr.mxu0 0.0
    %173 = vmatpush1.msra.mxu0 0.0
    %174 = vmatprep.subr.mxu0 0.0
    %175 = vmatpush1.msra.mxu0 0.0
    %176 = vmatprep.subr.mxu0 0.0
    %177 = vmatpush1.msra.mxu0 0.0
    %178 = vmatprep.subr.mxu0 0.0
    %179 = vmatpush1.msra.mxu0 0.0
    %180 = vmatprep.subr.mxu0 0.0
    %181 = vmatpush1.msra.mxu0 0.0
    %182 = vmatprep.subr.mxu0 0.0
    %183 = vmatpush1.msra.mxu0 0.0
    %184 = vmatprep.subr.mxu0 0.0
    %185 = vmatpush1.msra.mxu0 0.0
    %186 = vmatprep.subr.mxu0 0.0
    %187 = vmatpush1.msra.mxu0 0.0
    %188 = vmatprep.mubr.f32.mxu0 0.0
    %189 = vmatmul.mubr.f32.gmra.mrb[0].mxu0 %v115
    %v190 = vpop.f32.mrb[0].mxu0
    %v191 = vadd.f32 0.0, %v190
    %v192 = vpop.f32.mrb[0].mxu0
    %193 = vmatprep.mubr.f32.mxu0 0.0
    %194 = vmatmul.mubr.f32.gmra.mrb[0].mxu0 %v118
    %v195 = vpop.f32.mrb[0].mxu0
    %v196 = vadd.f32 0.0, %v195
    %v197 = vpop.f32.mrb[0].mxu0
    %198 = vdwg.mxu0
    %v199 = vmul.f32 %v12, %v191
    %v200 = vsub.f32 %v199, %v196
    %v201 = vld [vmem:[%s1 + $0x80] ss:$0 sm:$0xff]
    %v202 = vmul.f32 %v200, %v201
    %v203 = vld [vmem:[%s1 + $0x90] ss:$0 sm:$0xff]
    %v204 = vadd.f32 %v202, %v203
    %v205 = vmul.f32 %v204, %v204
    %v206 = vld [vmem:[%s1 + $0xa0] sm:$0xff]
    %v207 = vld [vmem:[%s1 + $0xa8] sm:$0xff]
    %v208 = vld [vmem:[%s1 + $0xb0] sm:$0xff]
    %v209 = vld [vmem:[%s1 + $0xb8] sm:$0xff]
    %v210 = vld [vmem:[%s1 + $0xc0] sm:$0xff]
    %v211 = vld [vmem:[%s1 + $0xc8] sm:$0xff]
    %v212 = vld [vmem:[%s1 + $0xd0] sm:$0xff]
    %v213 = vld [vmem:[%s1 + $0xd8] sm:$0xff]
    %v214 = vld [vmem:[%s1 + $0xe0] sm:$0xff]
    %v215 = vld [vmem:[%s1 + $0xe8] sm:$0xff]
    %v216 = vld [vmem:[%s1 + $0xf0] sm:$0x1f]
    %v217 = vld [vmem:[%s1 + $0xf8] sm:$0x1f]
    %v218 = vld [vmem:[%s1 + $0x100] sm:$0xff]
    %v219 = vld [vmem:[%s1 + $0x108] sm:$0xff]
    %v220 = vld [vmem:[%s1 + $0x110] sm:$0xff]
    %v221 = vld [vmem:[%s1 + $0x118] sm:$0xff]
    %v222 = vld [vmem:[%s1 + $0x120] sm:$0xff]
    %v223 = vld [vmem:[%s1 + $0x128] sm:$0xff]
    %v224 = vld [vmem:[%s1 + $0x130] sm:$0xff]
    %v225 = vld [vmem:[%s1 + $0x138] sm:$0xff]
    %v226 = vld [vmem:[%s1 + $0x140] sm:$0xff]
    %v227 = vld [vmem:[%s1 + $0x148] sm:$0xff]
    %v228 = vld [vmem:[%s1 + $0x150] sm:$0x1f]
    %v229 = vld [vmem:[%s1 + $0x158] sm:$0x1f]
    %v231 = vsel %vm20, %v204, 0
    %v234 = vsel %vm27, %v228, 0
    %v237 = vsel %vm27, %v229, 0
    %239 = vmatprep.subr.mxu0 %v219
    %240 = vmatpush1.msra.mxu0 %v218
    %241 = vmatprep.subr.mxu0 %v221
    %242 = vmatpush1.msra.mxu0 %v220
    %243 = vmatprep.subr.mxu0 %v223
    %244 = vmatpush1.msra.mxu0 %v222
    %245 = vmatprep.subr.mxu0 %v225
    %246 = vmatpush1.msra.mxu0 %v224
    %247 = vmatprep.subr.mxu0 %v227
    %248 = vmatpush1.msra.mxu0 %v226
    %249 = vmatprep.subr.mxu0 %v237
    %250 = vmatpush1.msra.mxu0 %v234
    %251 = vmatprep.subr.mxu0 0.0
    %252 = vmatpush1.msra.mxu0 0.0
    %253 = vmatprep.subr.mxu0 0.0
    %254 = vmatpush1.msra.mxu0 0.0
    %255 = vmatprep.subr.mxu0 0.0
    %256 = vmatpush1.msra.mxu0 0.0
    %257 = vmatprep.subr.mxu0 0.0
    %258 = vmatpush1.msra.mxu0 0.0
    %259 = vmatprep.subr.mxu0 0.0
    %260 = vmatpush1.msra.mxu0 0.0
    %261 = vmatprep.subr.mxu0 0.0
    %262 = vmatpush1.msra.mxu0 0.0
    %263 = vmatprep.subr.mxu0 0.0
    %264 = vmatpush1.msra.mxu0 0.0
    %265 = vmatprep.subr.mxu0 0.0
    %266 = vmatpush1.msra.mxu0 0.0
    %267 = vmatprep.subr.mxu0 0.0
    %268 = vmatpush1.msra.mxu0 0.0
    %269 = vmatprep.subr.mxu0 0.0
    %270 = vmatpush1.msra.mxu0 0.0
    %271 = vmatprep.subr.mxu0 0.0
    %272 = vmatpush1.msra.mxu0 0.0
    %273 = vmatprep.subr.mxu0 0.0
    %274 = vmatpush1.msra.mxu0 0.0
    %275 = vmatprep.subr.mxu0 0.0
    %276 = vmatpush1.msra.mxu0 0.0
    %277 = vmatprep.subr.mxu0 0.0
    %278 = vmatpush1.msra.mxu0 0.0
    %279 = vmatprep.subr.mxu0 0.0
    %280 = vmatpush1.msra.mxu0 0.0
    %281 = vmatprep.subr.mxu0 0.0
    %282 = vmatpush1.msra.mxu0 0.0
    %283 = vmatprep.subr.mxu0 0.0
    %284 = vmatpush1.msra.mxu0 0.0
    %285 = vmatprep.subr.mxu0 0.0
    %286 = vmatpush1.msra.mxu0 0.0
    %287 = vmatprep.subr.mxu0 0.0
    %288 = vmatpush1.msra.mxu0 0.0
    %289 = vmatprep.subr.mxu0 0.0
    %290 = vmatpush1.msra.mxu0 0.0
    %291 = vmatprep.subr.mxu0 0.0
    %292 = vmatpush1.msra.mxu0 0.0
    %293 = vmatprep.subr.mxu0 0.0
    %294 = vmatpush1.msra.mxu0 0.0
    %295 = vmatprep.subr.mxu0 0.0
    %296 = vmatpush1.msra.mxu0 0.0
    %297 = vmatprep.subr.mxu0 0.0
    %298 = vmatpush1.msra.mxu0 0.0
    %299 = vmatprep.subr.mxu0 0.0
    %300 = vmatpush1.msra.mxu0 0.0
    %301 = vmatprep.subr.mxu0 0.0
    %302 = vmatpush1.msra.mxu0 0.0
    %303 = vmatprep.mubr.f32.mxu0 0.0
    %304 = vmatmul.mubr.f32.gmra.mrb[0].mxu0 %v231
    %v305 = vpop.f32.mrb[0].mxu0
    %v306 = vadd.f32 0.0, %v305
    %v307 = vpop.f32.mrb[0].mxu0
    %v308 = vadd.f32 0.0, %v307
    %309 = vdwg.mxu0
    %v311 = vsel %vm20, %v205, 0
    %v314 = vsel %vm27, %v216, 0
    %v317 = vsel %vm27, %v217, 0
    %319 = vmatprep.subr.mxu0 %v207
    %320 = vmatpush1.msra.mxu0 %v206
    %321 = vmatprep.subr.mxu0 %v209
    %322 = vmatpush1.msra.mxu0 %v208
    %323 = vmatprep.subr.mxu0 %v211
    %324 = vmatpush1.msra.mxu0 %v210
    %325 = vmatprep.subr.mxu0 %v213
    %326 = vmatpush1.msra.mxu0 %v212
    %327 = vmatprep.subr.mxu0 %v215
    %328 = vmatpush1.msra.mxu0 %v214
    %329 = vmatprep.subr.mxu0 %v317
    %330 = vmatpush1.msra.mxu0 %v314
    %331 = vmatprep.subr.mxu0 0.0
    %332 = vmatpush1.msra.mxu0 0.0
    %333 = vmatprep.subr.mxu0 0.0
    %334 = vmatpush1.msra.mxu0 0.0
    %335 = vmatprep.subr.mxu0 0.0
    %336 = vmatpush1.msra.mxu0 0.0
    %337 = vmatprep.subr.mxu0 0.0
    %338 = vmatpush1.msra.mxu0 0.0
    %339 = vmatprep.subr.mxu0 0.0
    %340 = vmatpush1.msra.mxu0 0.0
    %341 = vmatprep.subr.mxu0 0.0
    %342 = vmatpush1.msra.mxu0 0.0
    %343 = vmatprep.subr.mxu0 0.0
    %344 = vmatpush1.msra.mxu0 0.0
    %345 = vmatprep.subr.mxu0 0.0
    %346 = vmatpush1.msra.mxu0 0.0
    %347 = vmatprep.subr.mxu0 0.0
    %348 = vmatpush1.msra.mxu0 0.0
    %349 = vmatprep.subr.mxu0 0.0
    %350 = vmatpush1.msra.mxu0 0.0
    %351 = vmatprep.subr.mxu0 0.0
    %352 = vmatpush1.msra.mxu0 0.0
    %353 = vmatprep.subr.mxu0 0.0
    %354 = vmatpush1.msra.mxu0 0.0
    %355 = vmatprep.subr.mxu0 0.0
    %356 = vmatpush1.msra.mxu0 0.0
    %357 = vmatprep.subr.mxu0 0.0
    %358 = vmatpush1.msra.mxu0 0.0
    %359 = vmatprep.subr.mxu0 0.0
    %360 = vmatpush1.msra.mxu0 0.0
    %361 = vmatprep.subr.mxu0 0.0
    %362 = vmatpush1.msra.mxu0 0.0
    %363 = vmatprep.subr.mxu0 0.0
    %364 = vmatpush1.msra.mxu0 0.0
    %365 = vmatprep.subr.mxu0 0.0
    %366 = vmatpush1.msra.mxu0 0.0
    %367 = vmatprep.subr.mxu0 0.0
    %368 = vmatpush1.msra.mxu0 0.0
    %369 = vmatprep.subr.mxu0 0.0
    %370 = vmatpush1.msra.mxu0 0.0
    %371 = vmatprep.subr.mxu0 0.0
    %372 = vmatpush1.msra.mxu0 0.0
    %373 = vmatprep.subr.mxu0 0.0
    %374 = vmatpush1.msra.mxu0 0.0
    %375 = vmatprep.subr.mxu0 0.0
    %376 = vmatpush1.msra.mxu0 0.0
    %377 = vmatprep.subr.mxu0 0.0
    %378 = vmatpush1.msra.mxu0 0.0
    %379 = vmatprep.subr.mxu0 0.0
    %380 = vmatpush1.msra.mxu0 0.0
    %381 = vmatprep.subr.mxu0 0.0
    %382 = vmatpush1.msra.mxu0 0.0
    %383 = vmatprep.mubr.f32.mxu0 0.0
    %384 = vmatmul.mubr.f32.gmra.mrb[0].mxu0 %v311
    %v385 = vpop.f32.mrb[0].mxu0
    %v386 = vadd.f32 %v306, %v385
    %v387 = vpop.f32.mrb[0].mxu0
    %v388 = vadd.f32 %v308, %v387
    %389 = vdwg.mxu0
    %s390 = scalar_lea.vmem %s1, 352
    %v391 = vld [vmem:[%s390] ss:$8 sm:$0x3]
    %v393 = vlaneseq
    %v394 = vshrl.u32 %v393, 7
    %v395 = vsub.s32 0, %v394
    %v396 = vrot.slane %v391, %v395
    %v397 = vlaneseq
    %v398 = vshrl.u32 %v397, 7
    %v399 = vsub.s32 1, %v398
    %v400 = vrot.slane %v391, %v399
    %v403 = vadd.f32 %v386, %v396
    %v404 = vadd.f32 %v388, %v400
    %v405 = vmax.f32 %v403, -60.0
    %v406 = vmax.f32 %v404, -60.0
    %v407 = vmul.f32 %v405, 1.442695
    %v408 = vpow.pop %v407
    %v409 = vmul.f32 %v406, 1.442695
    %v410 = vpow.pop %v409
    %v411 = vld [vmem:[%s1 + $0x170] sm:$0xff]
    %v412 = vld [vmem:[%s1 + $0x180] sm:$0xff]
    %v413 = vld [vmem:[%s1 + $0x190] sm:$0xff]
    %v414 = vld [vmem:[%s1 + $0x1a0] sm:$0xff]
    %v415 = vld [vmem:[%s1 + $0x1b0] sm:$0xff]
    %v416 = vld [vmem:[%s1 + $0x1c0] sm:$0xff]
    %v417 = vld [vmem:[%s1 + $0x1d0] sm:$0xff]
    %v418 = vld [vmem:[%s1 + $0x1e0] sm:$0xff]
    %v419 = vld [vmem:[%s1 + $0x1f0] sm:$0xff]
    %v420 = vld [vmem:[%s1 + $0x200] sm:$0xff]
    %v421 = vld [vmem:[%s1 + $0x210] sm:$0xff]
    %v422 = vld [vmem:[%s1 + $0x220] sm:$0xff]
    %v423 = vld [vmem:[%s1 + $0x230] sm:$0xff]
    %v424 = vld [vmem:[%s1 + $0x240] sm:$0xff]
    %v425 = vld [vmem:[%s1 + $0x250] sm:$0xff]
    %v426 = vld [vmem:[%s1 + $0x260] sm:$0xff]
    %v427 = vld [vmem:[%s1 + $0x270] sm:$0xff]
    %v428 = vld [vmem:[%s1 + $0x280] sm:$0xff]
    %vm429 = vcmask 130048
    %v431 = vsel %vm429, %v410, 0
    %433 = vmatprep.subr.mxu0 0.0
    %434 = vmatpush1.msra.mxu0 %v411
    %435 = vmatprep.subr.mxu0 0.0
    %436 = vmatpush1.msra.mxu0 %v412
    %437 = vmatprep.subr.mxu0 0.0
    %438 = vmatpush1.msra.mxu0 %v413
    %439 = vmatprep.subr.mxu0 0.0
    %440 = vmatpush1.msra.mxu0 %v414
    %441 = vmatprep.subr.mxu0 0.0
    %442 = vmatpush1.msra.mxu0 %v415
    %443 = vmatprep.subr.mxu0 0.0
    %444 = vmatpush1.msra.mxu0 %v416
    %445 = vmatprep.subr.mxu0 0.0
    %446 = vmatpush1.msra.mxu0 %v417
    %447 = vmatprep.subr.mxu0 0.0
    %448 = vmatpush1.msra.mxu0 %v418
    %449 = vmatprep.subr.mxu0 0.0
    %450 = vmatpush1.msra.mxu0 %v419
    %451 = vmatprep.subr.mxu0 0.0
    %452 = vmatpush1.msra.mxu0 %v420
    %453 = vmatprep.subr.mxu0 0.0
    %454 = vmatpush1.msra.mxu0 %v421
    %455 = vmatprep.subr.mxu0 0.0
    %456 = vmatpush1.msra.mxu0 %v422
    %457 = vmatprep.subr.mxu0 0.0
    %458 = vmatpush1.msra.mxu0 %v423
    %459 = vmatprep.subr.mxu0 0.0
    %460 = vmatpush1.msra.mxu0 %v424
    %461 = vmatprep.subr.mxu0 0.0
    %462 = vmatpush1.msra.mxu0 %v425
    %463 = vmatprep.subr.mxu0 0.0
    %464 = vmatpush1.msra.mxu0 %v426
    %465 = vmatprep.subr.mxu0 0.0
    %466 = vmatpush1.msra.mxu0 %v427
    %467 = vmatprep.subr.mxu0 0.0
    %468 = vmatpush1.msra.mxu0 %v428
    %469 = vmatprep.subr.mxu0 0.0
    %470 = vmatpush1.msra.mxu0 0.0
    %471 = vmatprep.subr.mxu0 0.0
    %472 = vmatpush1.msra.mxu0 0.0
    %473 = vmatprep.subr.mxu0 0.0
    %474 = vmatpush1.msra.mxu0 0.0
    %475 = vmatprep.subr.mxu0 0.0
    %476 = vmatpush1.msra.mxu0 0.0
    %477 = vmatprep.subr.mxu0 0.0
    %478 = vmatpush1.msra.mxu0 0.0
    %479 = vmatprep.subr.mxu0 0.0
    %480 = vmatpush1.msra.mxu0 0.0
    %481 = vmatprep.subr.mxu0 0.0
    %482 = vmatpush1.msra.mxu0 0.0
    %483 = vmatprep.subr.mxu0 0.0
    %484 = vmatpush1.msra.mxu0 0.0
    %485 = vmatprep.subr.mxu0 0.0
    %486 = vmatpush1.msra.mxu0 0.0
    %487 = vmatprep.subr.mxu0 0.0
    %488 = vmatpush1.msra.mxu0 0.0
    %489 = vmatprep.subr.mxu0 0.0
    %490 = vmatpush1.msra.mxu0 0.0
    %491 = vmatprep.subr.mxu0 0.0
    %492 = vmatpush1.msra.mxu0 0.0
    %493 = vmatprep.subr.mxu0 0.0
    %494 = vmatpush1.msra.mxu0 0.0
    %495 = vmatprep.subr.mxu0 0.0
    %496 = vmatpush1.msra.mxu0 0.0
    %497 = vmatprep.mubr.f32.mxu0 %v431
    %498 = vmatmul.mubr.f32.gmra.mrb[0].mxu0 %v408
    %v499 = vpop.f32.mrb[0].mxu0
    %v500 = vadd.f32 0.0, %v499
    %v501 = vpop.f32.mrb[0].mxu0
    %502 = vdwg.mxu0
    %v503 = vrcp.pop %v500
    %v504 = vld [vmem:[%s1 + $0x290] sm:$0xff]
    %v505 = vld [vmem:[%s1 + $0x2a0] sm:$0x1]
    %507 = vrot.lane.b32.xlu0 %v503, 92
    %v508 = vpop.permute.xlu0 %507
    %v509 = vsel %vm113, %v508, 0
    %v512 = vsel %vm120, %v505, 0
    %514 = vmatprep.subr.mxu0 0.0
    %515 = vmatpush1.msra.mxu0 %v504
    %516 = vmatprep.subr.mxu0 0.0
    %517 = vmatpush1.msra.mxu0 %v512
    %518 = vmatprep.subr.mxu0 0.0
    %519 = vmatpush1.msra.mxu0 0.0
    %520 = vmatprep.subr.mxu0 0.0
    %521 = vmatpush1.msra.mxu0 0.0
    %522 = vmatprep.subr.mxu0 0.0
    %523 = vmatpush1.msra.mxu0 0.0
    %524 = vmatprep.subr.mxu0 0.0
    %525 = vmatpush1.msra.mxu0 0.0
    %526 = vmatprep.subr.mxu0 0.0
    %527 = vmatpush1.msra.mxu0 0.0
    %528 = vmatprep.subr.mxu0 0.0
    %529 = vmatpush1.msra.mxu0 0.0
    %530 = vmatprep.subr.mxu0 0.0
    %531 = vmatpush1.msra.mxu0 0.0
    %532 = vmatprep.subr.mxu0 0.0
    %533 = vmatpush1.msra.mxu0 0.0
    %534 = vmatprep.subr.mxu0 0.0
    %535 = vmatpush1.msra.mxu0 0.0
    %536 = vmatprep.subr.mxu0 0.0
    %537 = vmatpush1.msra.mxu0 0.0
    %538 = vmatprep.subr.mxu0 0.0
    %539 = vmatpush1.msra.mxu0 0.0
    %540 = vmatprep.subr.mxu0 0.0
    %541 = vmatpush1.msra.mxu0 0.0
    %542 = vmatprep.subr.mxu0 0.0
    %543 = vmatpush1.msra.mxu0 0.0
    %544 = vmatprep.subr.mxu0 0.0
    %545 = vmatpush1.msra.mxu0 0.0
    %546 = vmatprep.subr.mxu0 0.0
    %547 = vmatpush1.msra.mxu0 0.0
    %548 = vmatprep.subr.mxu0 0.0
    %549 = vmatpush1.msra.mxu0 0.0
    %550 = vmatprep.subr.mxu0 0.0
    %551 = vmatpush1.msra.mxu0 0.0
    %552 = vmatprep.subr.mxu0 0.0
    %553 = vmatpush1.msra.mxu0 0.0
    %554 = vmatprep.subr.mxu0 0.0
    %555 = vmatpush1.msra.mxu0 0.0
    %556 = vmatprep.subr.mxu0 0.0
    %557 = vmatpush1.msra.mxu0 0.0
    %558 = vmatprep.subr.mxu0 0.0
    %559 = vmatpush1.msra.mxu0 0.0
    %560 = vmatprep.subr.mxu0 0.0
    %561 = vmatpush1.msra.mxu0 0.0
    %562 = vmatprep.subr.mxu0 0.0
    %563 = vmatpush1.msra.mxu0 0.0
    %564 = vmatprep.subr.mxu0 0.0
    %565 = vmatpush1.msra.mxu0 0.0
    %566 = vmatprep.subr.mxu0 0.0
    %567 = vmatpush1.msra.mxu0 0.0
    %568 = vmatprep.subr.mxu0 0.0
    %569 = vmatpush1.msra.mxu0 0.0
    %570 = vmatprep.subr.mxu0 0.0
    %571 = vmatpush1.msra.mxu0 0.0
    %572 = vmatprep.subr.mxu0 0.0
    %573 = vmatpush1.msra.mxu0 0.0
    %574 = vmatprep.subr.mxu0 0.0
    %575 = vmatpush1.msra.mxu0 0.0
    %576 = vmatprep.subr.mxu0 0.0
    %577 = vmatpush1.msra.mxu0 0.0
    %578 = vmatprep.mubr.f32.mxu0 0.0
    %579 = vmatmul.mubr.f32.gmra.mrb[0].mxu0 %v509
    %v580 = vpop.f32.mrb[0].mxu0
    %v581 = vadd.f32 0.0, %v580
    %v582 = vpop.f32.mrb[0].mxu0
    %583 = vdwg.mxu0
    %v584 = vmul.f32 %v500, %v581
    %v585 = vmul.f32 %v584, %v584
    %v586 = vld [vmem:[%s1 + $0x2b0] sm:$0xff]
    %v587 = vld [vmem:[%s1 + $0x2c0] sm:$0xff]
    %v588 = vld [vmem:[%s1 + $0x2d0] sm:$0xff]
    %v589 = vld [vmem:[%s1 + $0x2e0] sm:$0xff]
    %v590 = vld [vmem:[%s1 + $0x2f0] sm:$0xf]
    %v591 = vld [vmem:[%s1 + $0x300] sm:$0xff]
    %v592 = vld [vmem:[%s1 + $0x310] sm:$0xff]
    %v593 = vld [vmem:[%s1 + $0x320] sm:$0xff]
    %v594 = vld [vmem:[%s1 + $0x330] sm:$0xff]
    %v595 = vld [vmem:[%s1 + $0x340] sm:$0xf]
    %vm596 = vcmask 293888
    %v598 = vsel %vm596, %v584, 0
    %vm600 = vcmask 1043456
    %v602 = vsel %vm600, %v595, 0
    %604 = vmatprep.subr.mxu0 0.0
    %605 = vmatpush1.msra.mxu0 %v591
    %606 = vmatprep.subr.mxu0 0.0
    %607 = vmatpush1.msra.mxu0 %v592
    %608 = vmatprep.subr.mxu0 0.0
    %609 = vmatpush1.msra.mxu0 %v593
    %610 = vmatprep.subr.mxu0 0.0
    %611 = vmatpush1.msra.mxu0 %v594
    %612 = vmatprep.subr.mxu0 0.0
    %613 = vmatpush1.msra.mxu0 %v602
    %614 = vmatprep.subr.mxu0 0.0
    %615 = vmatpush1.msra.mxu0 0.0
    %616 = vmatprep.subr.mxu0 0.0
    %617 = vmatpush1.msra.mxu0 0.0
    %618 = vmatprep.subr.mxu0 0.0
    %619 = vmatpush1.msra.mxu0 0.0
    %620 = vmatprep.subr.mxu0 0.0
    %621 = vmatpush1.msra.mxu0 0.0
    %622 = vmatprep.subr.mxu0 0.0
    %623 = vmatpush1.msra.mxu0 0.0
    %624 = vmatprep.subr.mxu0 0.0
    %625 = vmatpush1.msra.mxu0 0.0
    %626 = vmatprep.subr.mxu0 0.0
    %627 = vmatpush1.msra.mxu0 0.0
    %628 = vmatprep.subr.mxu0 0.0
    %629 = vmatpush1.msra.mxu0 0.0
    %630 = vmatprep.subr.mxu0 0.0
    %631 = vmatpush1.msra.mxu0 0.0
    %632 = vmatprep.subr.mxu0 0.0
    %633 = vmatpush1.msra.mxu0 0.0
    %634 = vmatprep.subr.mxu0 0.0
    %635 = vmatpush1.msra.mxu0 0.0
    %636 = vmatprep.subr.mxu0 0.0
    %637 = vmatpush1.msra.mxu0 0.0
    %638 = vmatprep.subr.mxu0 0.0
    %639 = vmatpush1.msra.mxu0 0.0
    %640 = vmatprep.subr.mxu0 0.0
    %641 = vmatpush1.msra.mxu0 0.0
    %642 = vmatprep.subr.mxu0 0.0
    %643 = vmatpush1.msra.mxu0 0.0
    %644 = vmatprep.subr.mxu0 0.0
    %645 = vmatpush1.msra.mxu0 0.0
    %646 = vmatprep.subr.mxu0 0.0
    %647 = vmatpush1.msra.mxu0 0.0
    %648 = vmatprep.subr.mxu0 0.0
    %649 = vmatpush1.msra.mxu0 0.0
    %650 = vmatprep.subr.mxu0 0.0
    %651 = vmatpush1.msra.mxu0 0.0
    %652 = vmatprep.subr.mxu0 0.0
    %653 = vmatpush1.msra.mxu0 0.0
    %654 = vmatprep.subr.mxu0 0.0
    %655 = vmatpush1.msra.mxu0 0.0
    %656 = vmatprep.subr.mxu0 0.0
    %657 = vmatpush1.msra.mxu0 0.0
    %658 = vmatprep.subr.mxu0 0.0
    %659 = vmatpush1.msra.mxu0 0.0
    %660 = vmatprep.subr.mxu0 0.0
    %661 = vmatpush1.msra.mxu0 0.0
    %662 = vmatprep.subr.mxu0 0.0
    %663 = vmatpush1.msra.mxu0 0.0
    %664 = vmatprep.subr.mxu0 0.0
    %665 = vmatpush1.msra.mxu0 0.0
    %666 = vmatprep.subr.mxu0 0.0
    %667 = vmatpush1.msra.mxu0 0.0
    %668 = vmatprep.mubr.f32.mxu0 0.0
    %669 = vmatmul.mubr.f32.gmra.mrb[0].mxu0 %v598
    %v670 = vpop.f32.mrb[0].mxu0
    %v671 = vadd.f32 0.0, %v670
    %v672 = vpop.f32.mrb[0].mxu0
    %673 = vdwg.mxu0
    %v675 = vsel %vm596, %v585, 0
    %v678 = vsel %vm600, %v590, 0
    %680 = vmatprep.subr.mxu0 0.0
    %681 = vmatpush1.msra.mxu0 %v586
    %682 = vmatprep.subr.mxu0 0.0
    %683 = vmatpush1.msra.mxu0 %v587
    %684 = vmatprep.subr.mxu0 0.0
    %685 = vmatpush1.msra.mxu0 %v588
    %686 = vmatprep.subr.mxu0 0.0
    %687 = vmatpush1.msra.mxu0 %v589
    %688 = vmatprep.subr.mxu0 0.0
    %689 = vmatpush1.msra.mxu0 %v678
    %690 = vmatprep.subr.mxu0 0.0
    %691 = vmatpush1.msra.mxu0 0.0
    %692 = vmatprep.subr.mxu0 0.0
    %693 = vmatpush1.msra.mxu0 0.0
    %694 = vmatprep.subr.mxu0 0.0
    %695 = vmatpush1.msra.mxu0 0.0
    %696 = vmatprep.subr.mxu0 0.0
    %697 = vmatpush1.msra.mxu0 0.0
    %698 = vmatprep.subr.mxu0 0.0
    %699 = vmatpush1.msra.mxu0 0.0
    %700 = vmatprep.subr.mxu0 0.0
    %701 = vmatpush1.msra.mxu0 0.0
    %702 = vmatprep.subr.mxu0 0.0
    %703 = vmatpush1.msra.mxu0 0.0
    %704 = vmatprep.subr.mxu0 0.0
    %705 = vmatpush1.msra.mxu0 0.0
    %706 = vmatprep.subr.mxu0 0.0
    %707 = vmatpush1.msra.mxu0 0.0
    %708 = vmatprep.subr.mxu0 0.0
    %709 = vmatpush1.msra.mxu0 0.0
    %710 = vmatprep.subr.mxu0 0.0
    %711 = vmatpush1.msra.mxu0 0.0
    %712 = vmatprep.subr.mxu0 0.0
    %713 = vmatpush1.msra.mxu0 0.0
    %714 = vmatprep.subr.mxu0 0.0
    %715 = vmatpush1.msra.mxu0 0.0
    %716 = vmatprep.subr.mxu0 0.0
    %717 = vmatpush1.msra.mxu0 0.0
    %718 = vmatprep.subr.mxu0 0.0
    %719 = vmatpush1.msra.mxu0 0.0
    %720 = vmatprep.subr.mxu0 0.0
    %721 = vmatpush1.msra.mxu0 0.0
    %722 = vmatprep.subr.mxu0 0.0
    %723 = vmatpush1.msra.mxu0 0.0
    %724 = vmatprep.subr.mxu0 0.0
    %725 = vmatpush1.msra.mxu0 0.0
    %726 = vmatprep.subr.mxu0 0.0
    %727 = vmatpush1.msra.mxu0 0.0
    %728 = vmatprep.subr.mxu0 0.0
    %729 = vmatpush1.msra.mxu0 0.0
    %730 = vmatprep.subr.mxu0 0.0
    %731 = vmatpush1.msra.mxu0 0.0
    %732 = vmatprep.subr.mxu0 0.0
    %733 = vmatpush1.msra.mxu0 0.0
    %734 = vmatprep.subr.mxu0 0.0
    %735 = vmatpush1.msra.mxu0 0.0
    %736 = vmatprep.subr.mxu0 0.0
    %737 = vmatpush1.msra.mxu0 0.0
    %738 = vmatprep.subr.mxu0 0.0
    %739 = vmatpush1.msra.mxu0 0.0
    %740 = vmatprep.subr.mxu0 0.0
    %741 = vmatpush1.msra.mxu0 0.0
    %742 = vmatprep.subr.mxu0 0.0
    %743 = vmatpush1.msra.mxu0 0.0
    %744 = vmatprep.mubr.f32.mxu0 0.0
    %745 = vmatmul.mubr.f32.gmra.mrb[0].mxu0 %v675
    %v746 = vpop.f32.mrb[0].mxu0
    %v747 = vadd.f32 %v671, %v746
    %v748 = vpop.f32.mrb[0].mxu0
    %749 = vdwg.mxu0
    %v750 = vld [vmem:[%s1 + $0x350] ss:$0 sm:$0xff]
    %v751 = vadd.f32 %v747, %v750
    %v752 = vmax.f32 %v751, -60.0
    %v753 = vmul.f32 %v752, 1.442695
    %v754 = vpow.pop %v753
    %v755 = vld [vmem:[%s1 + $0x360] sm:$0xff]
    %v756 = vld [vmem:[%s1 + $0x370] sm:$0xff]
    %v757 = vld [vmem:[%s1 + $0x380] sm:$0xff]
    %v758 = vld [vmem:[%s1 + $0x390] sm:$0xff]
    %v759 = vld [vmem:[%s1 + $0x3a0] sm:$0xff]
    %v760 = vld [vmem:[%s1 + $0x3b0] sm:$0xff]
    %v761 = vld [vmem:[%s1 + $0x3c0] sm:$0xff]
    %v762 = vld [vmem:[%s1 + $0x3d0] sm:$0xff]
    %vm763 = vcmask 523264
    %v765 = vsel %vm763, %v754, 0
    %767 = vmatprep.subr.mxu0 0.0
    %768 = vmatpush1.msra.mxu0 %v755
    %769 = vmatprep.subr.mxu0 0.0
    %770 = vmatpush1.msra.mxu0 %v756
    %771 = vmatprep.subr.mxu0 0.0
    %772 = vmatpush1.msra.mxu0 %v757
    %773 = vmatprep.subr.mxu0 0.0
    %774 = vmatpush1.msra.mxu0 %v758
    %775 = vmatprep.subr.mxu0 0.0
    %776 = vmatpush1.msra.mxu0 %v759
    %777 = vmatprep.subr.mxu0 0.0
    %778 = vmatpush1.msra.mxu0 %v760
    %779 = vmatprep.subr.mxu0 0.0
    %780 = vmatpush1.msra.mxu0 %v761
    %781 = vmatprep.subr.mxu0 0.0
    %782 = vmatpush1.msra.mxu0 %v762
    %783 = vmatprep.subr.mxu0 0.0
    %784 = vmatpush1.msra.mxu0 0.0
    %785 = vmatprep.subr.mxu0 0.0
    %786 = vmatpush1.msra.mxu0 0.0
    %787 = vmatprep.subr.mxu0 0.0
    %788 = vmatpush1.msra.mxu0 0.0
    %789 = vmatprep.subr.mxu0 0.0
    %790 = vmatpush1.msra.mxu0 0.0
    %791 = vmatprep.subr.mxu0 0.0
    %792 = vmatpush1.msra.mxu0 0.0
    %793 = vmatprep.subr.mxu0 0.0
    %794 = vmatpush1.msra.mxu0 0.0
    %795 = vmatprep.subr.mxu0 0.0
    %796 = vmatpush1.msra.mxu0 0.0
    %797 = vmatprep.subr.mxu0 0.0
    %798 = vmatpush1.msra.mxu0 0.0
    %799 = vmatprep.subr.mxu0 0.0
    %800 = vmatpush1.msra.mxu0 0.0
    %801 = vmatprep.subr.mxu0 0.0
    %802 = vmatpush1.msra.mxu0 0.0
    %803 = vmatprep.subr.mxu0 0.0
    %804 = vmatpush1.msra.mxu0 0.0
    %805 = vmatprep.subr.mxu0 0.0
    %806 = vmatpush1.msra.mxu0 0.0
    %807 = vmatprep.subr.mxu0 0.0
    %808 = vmatpush1.msra.mxu0 0.0
    %809 = vmatprep.subr.mxu0 0.0
    %810 = vmatpush1.msra.mxu0 0.0
    %811 = vmatprep.subr.mxu0 0.0
    %812 = vmatpush1.msra.mxu0 0.0
    %813 = vmatprep.subr.mxu0 0.0
    %814 = vmatpush1.msra.mxu0 0.0
    %815 = vmatprep.subr.mxu0 0.0
    %816 = vmatpush1.msra.mxu0 0.0
    %817 = vmatprep.subr.mxu0 0.0
    %818 = vmatpush1.msra.mxu0 0.0
    %819 = vmatprep.subr.mxu0 0.0
    %820 = vmatpush1.msra.mxu0 0.0
    %821 = vmatprep.subr.mxu0 0.0
    %822 = vmatpush1.msra.mxu0 0.0
    %823 = vmatprep.subr.mxu0 0.0
    %824 = vmatpush1.msra.mxu0 0.0
    %825 = vmatprep.subr.mxu0 0.0
    %826 = vmatpush1.msra.mxu0 0.0
    %827 = vmatprep.subr.mxu0 0.0
    %828 = vmatpush1.msra.mxu0 0.0
    %829 = vmatprep.subr.mxu0 0.0
    %830 = vmatpush1.msra.mxu0 0.0
    %831 = vmatprep.mubr.f32.mxu0 0.0
    %832 = vmatmul.mubr.f32.gmra.mrb[0].mxu0 %v765
    %v833 = vpop.f32.mrb[0].mxu0
    %v834 = vadd.f32 0.0, %v833
    %v835 = vpop.f32.mrb[0].mxu0
    %836 = vdwg.mxu0
    %v837 = vrcp.pop %v834
    %839 = vrot.lane.b32.xlu0 %v837, 124
    %v840 = vpop.permute.xlu0 %839
    %v842 = vmul.f32 %v834, %v840
    %vm843 = vcmask 31744
    %v844 = vsel %vm843, %v842, -inf
    %845 = vmax.xlane.f32.xlu0 %v844
    %v846 = vpop.xlane.xlu0 %845
    %v847 = vsub.f32 %v842, %v846
    %v848 = vmul.f32 %v847, 1.442695
    %v849 = vpow.pop %v848
    %v850 = vsel %vm843, %v849, 0.0
    %851 = vadd.xlane.f32.xlu0 %v850
    %v852 = vpop.xlane.xlu0 %851
    %v853 = vrcp.pop %v852
    %v854 = vmul.f32 %v849, %v853
    %v855 = vld [vmem:[%s1 + $0x3e0] sm:$0xff]
    %v856 = vld [vmem:[%s1 + $0x3f0] sm:$0x1]
    %v857 = vld [vmem:[%s1 + $0x400] ss:$0 sm:$0xff]
    %858 = vrot.lane.b32.xlu0 %v12, 83
    %v859 = vpop.permute.xlu0 %858
    %v860 = vsel %vm113, %v859, 0
    %v863 = vsel %vm120, %v856, 0
    %865 = vmatprep.subr.mxu0 0.0
    %866 = vmatpush1.msra.mxu0 %v855
    %867 = vmatprep.subr.mxu0 0.0
    %868 = vmatpush1.msra.mxu0 %v863
    %869 = vmatprep.subr.mxu0 0.0
    %870 = vmatpush1.msra.mxu0 0.0
    %871 = vmatprep.subr.mxu0 0.0
    %872 = vmatpush1.msra.mxu0 0.0
    %873 = vmatprep.subr.mxu0 0.0
    %874 = vmatpush1.msra.mxu0 0.0
    %875 = vmatprep.subr.mxu0 0.0
    %876 = vmatpush1.msra.mxu0 0.0
    %877 = vmatprep.subr.mxu0 0.0
    %878 = vmatpush1.msra.mxu0 0.0
    %879 = vmatprep.subr.mxu0 0.0
    %880 = vmatpush1.msra.mxu0 0.0
    %881 = vmatprep.subr.mxu0 0.0
    %882 = vmatpush1.msra.mxu0 0.0
    %883 = vmatprep.subr.mxu0 0.0
    %884 = vmatpush1.msra.mxu0 0.0
    %885 = vmatprep.subr.mxu0 0.0
    %886 = vmatpush1.msra.mxu0 0.0
    %887 = vmatprep.subr.mxu0 0.0
    %888 = vmatpush1.msra.mxu0 0.0
    %889 = vmatprep.subr.mxu0 0.0
    %890 = vmatpush1.msra.mxu0 0.0
    %891 = vmatprep.subr.mxu0 0.0
    %892 = vmatpush1.msra.mxu0 0.0
    %893 = vmatprep.subr.mxu0 0.0
    %894 = vmatpush1.msra.mxu0 0.0
    %895 = vmatprep.subr.mxu0 0.0
    %896 = vmatpush1.msra.mxu0 0.0
    %897 = vmatprep.subr.mxu0 0.0
    %898 = vmatpush1.msra.mxu0 0.0
    %899 = vmatprep.subr.mxu0 0.0
    %900 = vmatpush1.msra.mxu0 0.0
    %901 = vmatprep.subr.mxu0 0.0
    %902 = vmatpush1.msra.mxu0 0.0
    %903 = vmatprep.subr.mxu0 0.0
    %904 = vmatpush1.msra.mxu0 0.0
    %905 = vmatprep.subr.mxu0 0.0
    %906 = vmatpush1.msra.mxu0 0.0
    %907 = vmatprep.subr.mxu0 0.0
    %908 = vmatpush1.msra.mxu0 0.0
    %909 = vmatprep.subr.mxu0 0.0
    %910 = vmatpush1.msra.mxu0 0.0
    %911 = vmatprep.subr.mxu0 0.0
    %912 = vmatpush1.msra.mxu0 0.0
    %913 = vmatprep.subr.mxu0 0.0
    %914 = vmatpush1.msra.mxu0 0.0
    %915 = vmatprep.subr.mxu0 0.0
    %916 = vmatpush1.msra.mxu0 0.0
    %917 = vmatprep.subr.mxu0 0.0
    %918 = vmatpush1.msra.mxu0 0.0
    %919 = vmatprep.subr.mxu0 0.0
    %920 = vmatpush1.msra.mxu0 0.0
    %921 = vmatprep.subr.mxu0 0.0
    %922 = vmatpush1.msra.mxu0 0.0
    %923 = vmatprep.subr.mxu0 0.0
    %924 = vmatpush1.msra.mxu0 0.0
    %925 = vmatprep.subr.mxu0 0.0
    %926 = vmatpush1.msra.mxu0 0.0
    %927 = vmatprep.subr.mxu0 0.0
    %928 = vmatpush1.msra.mxu0 0.0
    %929 = vmatprep.mubr.f32.mxu0 0.0
    %930 = vmatmul.mubr.f32.gmra.mrb[0].mxu0 %v860
    %v931 = vpop.f32.mrb[0].mxu0
    %v932 = vadd.f32 %v857, %v931
    %v933 = vpop.f32.mrb[0].mxu0
    %934 = vdwg.mxu0
    %v935 = vld [vmem:[%s1 + $0x410] sm:$0xf]
    %v937 = vsel %vm843, %v854, 0
    %v940 = vsel %vm600, %v935, 0
    %942 = vmatprep.subr.mxu0 0.0
    %943 = vmatpush1.msra.mxu0 %v940
    %944 = vmatprep.subr.mxu0 0.0
    %945 = vmatpush1.msra.mxu0 0.0
    %946 = vmatprep.subr.mxu0 0.0
    %947 = vmatpush1.msra.mxu0 0.0
    %948 = vmatprep.subr.mxu0 0.0
    %949 = vmatpush1.msra.mxu0 0.0
    %950 = vmatprep.subr.mxu0 0.0
    %951 = vmatpush1.msra.mxu0 0.0
    %952 = vmatprep.subr.mxu0 0.0
    %953 = vmatpush1.msra.mxu0 0.0
    %954 = vmatprep.subr.mxu0 0.0
    %955 = vmatpush1.msra.mxu0 0.0
    %956 = vmatprep.subr.mxu0 0.0
    %957 = vmatpush1.msra.mxu0 0.0
    %958 = vmatprep.subr.mxu0 0.0
    %959 = vmatpush1.msra.mxu0 0.0
    %960 = vmatprep.subr.mxu0 0.0
    %961 = vmatpush1.msra.mxu0 0.0
    %962 = vmatprep.subr.mxu0 0.0
    %963 = vmatpush1.msra.mxu0 0.0
    %964 = vmatprep.subr.mxu0 0.0
    %965 = vmatpush1.msra.mxu0 0.0
    %966 = vmatprep.subr.mxu0 0.0
    %967 = vmatpush1.msra.mxu0 0.0
    %968 = vmatprep.subr.mxu0 0.0
    %969 = vmatpush1.msra.mxu0 0.0
    %970 = vmatprep.subr.mxu0 0.0
    %971 = vmatpush1.msra.mxu0 0.0
    %972 = vmatprep.subr.mxu0 0.0
    %973 = vmatpush1.msra.mxu0 0.0
    %974 = vmatprep.subr.mxu0 0.0
    %975 = vmatpush1.msra.mxu0 0.0
    %976 = vmatprep.subr.mxu0 0.0
    %977 = vmatpush1.msra.mxu0 0.0
    %978 = vmatprep.subr.mxu0 0.0
    %979 = vmatpush1.msra.mxu0 0.0
    %980 = vmatprep.subr.mxu0 0.0
    %981 = vmatpush1.msra.mxu0 0.0
    %982 = vmatprep.subr.mxu0 0.0
    %983 = vmatpush1.msra.mxu0 0.0
    %984 = vmatprep.subr.mxu0 0.0
    %985 = vmatpush1.msra.mxu0 0.0
    %986 = vmatprep.subr.mxu0 0.0
    %987 = vmatpush1.msra.mxu0 0.0
    %988 = vmatprep.subr.mxu0 0.0
    %989 = vmatpush1.msra.mxu0 0.0
    %990 = vmatprep.subr.mxu0 0.0
    %991 = vmatpush1.msra.mxu0 0.0
    %992 = vmatprep.subr.mxu0 0.0
    %993 = vmatpush1.msra.mxu0 0.0
    %994 = vmatprep.subr.mxu0 0.0
    %995 = vmatpush1.msra.mxu0 0.0
    %996 = vmatprep.subr.mxu0 0.0
    %997 = vmatpush1.msra.mxu0 0.0
    %998 = vmatprep.subr.mxu0 0.0
    %999 = vmatpush1.msra.mxu0 0.0
    %1000 = vmatprep.subr.mxu0 0.0
    %1001 = vmatpush1.msra.mxu0 0.0
    %1002 = vmatprep.subr.mxu0 0.0
    %1003 = vmatpush1.msra.mxu0 0.0
    %1004 = vmatprep.subr.mxu0 0.0
    %1005 = vmatpush1.msra.mxu0 0.0
    %1006 = vmatprep.mubr.f32.mxu0 0.0
    %1007 = vmatmul.mubr.f32.gmra.mrb[0].mxu0 %v937
    %v1008 = vpop.f32.mrb[0].mxu0
    %v1009 = vadd.f32 0.0, %v1008
    %v1010 = vpop.f32.mrb[0].mxu0
    %1011 = vdwg.mxu0
    %v1012 = vmul.f32 %v932, %v1009
    %v1013 = vld [vmem:[%s1 + $0x420] sm:$0xff]
    %v1014 = vld [vmem:[%s1 + $0x430] sm:$0xff]
    %v1015 = vld [vmem:[%s1 + $0x440] sm:$0xff]
    %v1016 = vld [vmem:[%s1 + $0x450] sm:$0xff]
    %v1017 = vld [vmem:[%s1 + $0x460] sm:$0xf]
    %v1019 = vsel %vm596, %v1012, 0
    %v1022 = vsel %vm600, %v1017, 0
    %1024 = vmatprep.subr.mxu0 0.0
    %1025 = vmatpush1.msra.mxu0 %v1013
    %1026 = vmatprep.subr.mxu0 0.0
    %1027 = vmatpush1.msra.mxu0 %v1014
    %1028 = vmatprep.subr.mxu0 0.0
    %1029 = vmatpush1.msra.mxu0 %v1015
    %1030 = vmatprep.subr.mxu0 0.0
    %1031 = vmatpush1.msra.mxu0 %v1016
    %1032 = vmatprep.subr.mxu0 0.0
    %1033 = vmatpush1.msra.mxu0 %v1022
    %1034 = vmatprep.subr.mxu0 0.0
    %1035 = vmatpush1.msra.mxu0 0.0
    %1036 = vmatprep.subr.mxu0 0.0
    %1037 = vmatpush1.msra.mxu0 0.0
    %1038 = vmatprep.subr.mxu0 0.0
    %1039 = vmatpush1.msra.mxu0 0.0
    %1040 = vmatprep.subr.mxu0 0.0
    %1041 = vmatpush1.msra.mxu0 0.0
    %1042 = vmatprep.subr.mxu0 0.0
    %1043 = vmatpush1.msra.mxu0 0.0
    %1044 = vmatprep.subr.mxu0 0.0
    %1045 = vmatpush1.msra.mxu0 0.0
    %1046 = vmatprep.subr.mxu0 0.0
    %1047 = vmatpush1.msra.mxu0 0.0
    %1048 = vmatprep.subr.mxu0 0.0
    %1049 = vmatpush1.msra.mxu0 0.0
    %1050 = vmatprep.subr.mxu0 0.0
    %1051 = vmatpush1.msra.mxu0 0.0
    %1052 = vmatprep.subr.mxu0 0.0
    %1053 = vmatpush1.msra.mxu0 0.0
    %1054 = vmatprep.subr.mxu0 0.0
    %1055 = vmatpush1.msra.mxu0 0.0
    %1056 = vmatprep.subr.mxu0 0.0
    %1057 = vmatpush1.msra.mxu0 0.0
    %1058 = vmatprep.subr.mxu0 0.0
    %1059 = vmatpush1.msra.mxu0 0.0
    %1060 = vmatprep.subr.mxu0 0.0
    %1061 = vmatpush1.msra.mxu0 0.0
    %1062 = vmatprep.subr.mxu0 0.0
    %1063 = vmatpush1.msra.mxu0 0.0
    %1064 = vmatprep.subr.mxu0 0.0
    %1065 = vmatpush1.msra.mxu0 0.0
    %1066 = vmatprep.subr.mxu0 0.0
    %1067 = vmatpush1.msra.mxu0 0.0
    %1068 = vmatprep.subr.mxu0 0.0
    %1069 = vmatpush1.msra.mxu0 0.0
    %1070 = vmatprep.subr.mxu0 0.0
    %1071 = vmatpush1.msra.mxu0 0.0
    %1072 = vmatprep.subr.mxu0 0.0
    %1073 = vmatpush1.msra.mxu0 0.0
    %1074 = vmatprep.subr.mxu0 0.0
    %1075 = vmatpush1.msra.mxu0 0.0
    %1076 = vmatprep.subr.mxu0 0.0
    %1077 = vmatpush1.msra.mxu0 0.0
    %1078 = vmatprep.subr.mxu0 0.0
    %1079 = vmatpush1.msra.mxu0 0.0
    %1080 = vmatprep.subr.mxu0 0.0
    %1081 = vmatpush1.msra.mxu0 0.0
    %1082 = vmatprep.subr.mxu0 0.0
    %1083 = vmatpush1.msra.mxu0 0.0
    %1084 = vmatprep.subr.mxu0 0.0
    %1085 = vmatpush1.msra.mxu0 0.0
    %1086 = vmatprep.subr.mxu0 0.0
    %1087 = vmatpush1.msra.mxu0 0.0
    %1088 = vmatprep.mubr.f32.mxu0 0.0
    %1089 = vmatmul.mubr.f32.gmra.mrb[0].mxu0 %v1019
    %v1090 = vpop.f32.mrb[0].mxu0
    %v1091 = vadd.f32 0.0, %v1090
    %v1092 = vpop.f32.mrb[0].mxu0
    %1093 = vdwg.mxu0
    %1094 = vst.msk [vmem:[#allocation2] sm:$0xff] %vm113, %v1091
    // Predicated region
    $region10: #{classify_fls.1} parent=1 // pred_check
      _
    $region11: #{classify_fls.1} parent=1 // pred_check_branch
      %1096 = sbr.rel (0) target = $region13
    $region12: #{classify_fls.1} parent=1 // pred_region
      %s1098 = ssub.s32 128, 128
      %1099 = vsyncadd [#allocation3], %s1098
      %s1101 = sshll.u32 [#allocation2], 4
      %s1102 = int_to_ptr.vmem [resolvable:$true] %s1101
      %1104 = dma.vmem_to_hbm [thread:$0]  %s1102, 128, %s2, [#allocation3]
    $region13: #{classify_fls.1} parent=1 // pred_fallthru
      _
    // Predicated region
    $region14: #{classify_fls.1} parent=1 // pred_check
      _
    $region15: #{classify_fls.1} parent=1 // pred_check_branch
      %1106 = sbr.rel (0) target = $region17
    $region16: #{classify_fls.1} parent=1 // pred_region
      %1107 = dma.done [#allocation3], 128
    $region17: #{classify_fls.1} parent=1 // pred_fallthru
      _
    %1108 = vsyncpa [#allocation3], 1

</llo_original>
